<compile_context>
chip_gen: v5e
topology: v5e:2x2
jax: 0.10.0
libtpu: 0.0.40
codegen_flags: <defaults>
</compile_context>

<pallas_src>
import functools

import jax
import jax.numpy as jnp
from jax.experimental import pallas as pl
from jax.experimental.pallas import tpu as pltpu


def _round_up(x, m):
    return ((x + m - 1) // m) * m


def _policy_kernel(x_ref, w1_ref, b1_ref, w2_ref, b2_ref, wh_ref, bh_ref,
                   out_ref, *, action_dim, approx_sigmoid):
    """One batch tile: x (TM, state_dim) bf16 -> out (TM, 2A) f32 (mean | std)."""
    x = x_ref[...]                                               # bf16 MXU operand

    # Linear(state_dim, 256) + ReLU   (f32 accumulate on MXU, f32 VPU math)
    h1 = jnp.dot(x, w1_ref[...], preferred_element_type=jnp.float32) + b1_ref[...]
    h1 = jnp.maximum(h1, 0.0)

    # Linear(256, 128) + ReLU
    h2 = jnp.dot(h1.astype(w2_ref.dtype), w2_ref[...],
                 preferred_element_type=jnp.float32) + b2_ref[...]
    h2 = jnp.maximum(h2, 0.0)                                    # (TM, 128)

    # Fused block-diagonal head: cols [:A] = mean head (h2 rows 0:64),
    # cols [A:] = std head (h2 rows 64:128).  The zero blocks make it exactly
    # equal to the two separate 64-wide matmuls, in one MXU pass.
    head = jnp.dot(h2.astype(wh_ref.dtype), wh_ref[...],
                   preferred_element_type=jnp.float32) + bh_ref[...]   # (TM, 2A)

    # Sigmoid only on the std half.  exp runs on the EUP; reciprocal is either
    # the EUP approximation (rollout) or the exact divide (training numerics).
    e = jnp.exp(-head)
    if approx_sigmoid:
        sig = pl.reciprocal(1.0 + e, approx=True)
    else:
        sig = 1.0 / (1.0 + e)
    lane = jax.lax.broadcasted_iota(jnp.int32, head.shape, dimension=1)
    out_ref[...] = jnp.where(lane >= action_dim, sig, head).astype(out_ref.dtype)


def prepare_policy_params(params, compute_dtype=jnp.bfloat16):
    """Build kernel-ready params ONCE: bf16 MXU weights, f32 biases, and the
    fused block-diagonal (128, 2A) head weight / (1, 2A) head bias."""
    A = params["wm"].shape[1]
    z = jnp.zeros((64, A), params["wm"].dtype)
    w_head = jnp.concatenate(
        [jnp.concatenate([params["wm"], z], axis=1),
         jnp.concatenate([z, params["ws"]], axis=1)], axis=0)          # (128, 2A)
    b_head = jnp.concatenate([params["bm"], params["bs"]], axis=1)      # (1, 2A)
    return {
        "w1": params["w1"].astype(compute_dtype),
        "b1": params["b1"].astype(jnp.float32),
        "w2": params["w2"].astype(compute_dtype),
        "b2": params["b2"].astype(jnp.float32),
        "wh": w_head.astype(compute_dtype),
        "bh": b_head.astype(jnp.float32),
    }


def policy_model_forward(states, prepared, *, block_m=1024, min_split_rows=256,
                         approx_sigmoid=True, compute_dtype=jnp.bfloat16):
    """states: (B, state_dim) f32.  Returns (mean, std), each (B, action_dim) f32."""
    B, state_dim = states.shape
    A = prepared["wh"].shape[1] // 2

    x = states.astype(compute_dtype)

    # Batch tiling in multiples of 16 (bf16 sublane pack).  Large tiles
    # amortize the ~600-cycle per-grid-step overhead; when the whole batch
    # would otherwise be a single tile but is still large, split it in two so
    # the "parallel" grid axis can be sharded across both v7x TensorCores.
    b16 = _round_up(max(B, 16), 16)
    tm = min(block_m, b16)
    if b16 <= tm and b16 >= 2 * min_split_rows:
        tm = _round_up((b16 + 1) // 2, 16)
    padded_b = _round_up(b16, tm)
    if padded_b != B:
        x = jnp.pad(x, ((0, padded_b - B), (0, 0)))
    grid = (padded_b // tm,)

    const = lambda i: (0, 0)   # weights/biases VMEM-resident across all steps

    out = pl.pallas_call(
        functools.partial(_policy_kernel, action_dim=A,
                          approx_sigmoid=approx_sigmoid),
        out_shape=jax.ShapeDtypeStruct((padded_b, 2 * A), jnp.float32),
        grid=grid,
        in_specs=[
            pl.BlockSpec((tm, state_dim), lambda i: (i, 0)),   # streamed states
            pl.BlockSpec((state_dim, 256), const),             # W1
            pl.BlockSpec((1, 256), const),                     # b1
            pl.BlockSpec((256, 128), const),                   # W2
            pl.BlockSpec((1, 128), const),                     # b2
            pl.BlockSpec((128, 2 * A), const),                 # fused head W
            pl.BlockSpec((1, 2 * A), const),                   # fused head b
        ],
        out_specs=pl.BlockSpec((tm, 2 * A), lambda i: (i, 0)),
        compiler_params=pltpu.CompilerParams(
            dimension_semantics=("parallel",),
            vmem_limit_bytes=8 * 1024 * 1024,   # actual footprint << 2 MiB
        ),
    )(x, prepared["w1"], prepared["b1"], prepared["w2"], prepared["b2"],
      prepared["wh"], prepared["bh"])

    out = out[:B]
    return out[:, :A], out[:, A:]


def init_params(key, state_dim, action_dim):
    """Deterministic PyTorch-style (uniform +-1/sqrt(fan_in)) init.
    Weights kept as (in_features, out_features)."""
    def linear(key, fan_in, fan_out):
        kw, kb = jax.random.split(key)
        bound = 1.0 / jnp.sqrt(fan_in)
        w = jax.random.uniform(kw, (fan_in, fan_out), jnp.float32, -bound, bound)
        b = jax.random.uniform(kb, (1, fan_out), jnp.float32, -bound, bound)
        return w, b

    k1, k2, k3, k4 = jax.random.split(key, 4)
    w1, b1 = linear(k1, state_dim, 256)
    w2, b2 = linear(k2, 256, 128)
    wm, bm = linear(k3, 64, action_dim)
    ws, bs = linear(k4, 64, action_dim)
    return {"w1": w1, "b1": b1, "w2": w2, "b2": b2,
            "wm": wm, "bm": bm, "ws": ws, "bs": bs}


def reference_forward(states, p, compute_dtype=jnp.float32):
    """Pure-JAX reference.  compute_dtype=bfloat16 mimics the kernel's MXU
    numerics (bf16 operands, f32 accumulate); float32 is the PyTorch math."""
    def dot(a, w):
        return jnp.dot(a.astype(compute_dtype), w.astype(compute_dtype),
                       preferred_element_type=jnp.float32)
    h = jnp.maximum(dot(states, p["w1"]) + p["b1"], 0.0)
    h = jnp.maximum(dot(h, p["w2"]) + p["b2"], 0.0)
    mean = dot(h[:, :64], p["wm"]) + p["bm"]
    std = jax.nn.sigmoid(dot(h[:, 64:128], p["ws"]) + p["bs"])
    return mean, std


if __name__ == "__main__":
    key = jax.random.PRNGKey(0)
    k_params, k_states = jax.random.split(key)

    batch = 8
    state_dim = 32
    action_dim = 4

    params = init_params(k_params, state_dim, action_dim)
    prepared = prepare_policy_params(params)        # fused head built once
    states = jax.random.normal(k_states, (batch, state_dim), jnp.float32)

    mean, std = policy_model_forward(states, prepared)
    jax.block_until_ready((mean, std))

    # Tight check vs a reference that matches the kernel's bf16-operand numerics.
    ref_mean_bf, ref_std_bf = reference_forward(states, params,
                                                compute_dtype=jnp.bfloat16)
    assert jnp.allclose(mean, ref_mean_bf, atol=5e-3, rtol=5e-3)
    assert jnp.allclose(std, ref_std_bf, atol=5e-3, rtol=5e-3)

    # Loose sanity check vs full-f32 PyTorch-equivalent math.
    ref_mean_f32, ref_std_f32 = reference_forward(states, params,
                                                  compute_dtype=jnp.float32)
    assert jnp.allclose(mean, ref_mean_f32, atol=5e-2, rtol=5e-2)
    assert jnp.allclose(std, ref_std_f32, atol=5e-2, rtol=5e-2)
    assert jnp.all((std > 0.0) & (std < 1.0))

    # Exercise the multi-tile / megacore path (2 grid steps) at larger B.
    big_states = jax.random.normal(k_states, (1000, state_dim), jnp.float32)
    big_mean, big_std = policy_model_forward(big_states, prepared,
                                             approx_sigmoid=False)
    jax.block_until_ready((big_mean, big_std))
    ref_bm, ref_bs = reference_forward(big_states, params,
                                       compute_dtype=jnp.bfloat16)
    assert jnp.allclose(big_mean, ref_bm, atol=5e-3, rtol=5e-3)
    assert jnp.allclose(big_std, ref_bs, atol=5e-3, rtol=5e-3)

    print("KERNEL_OK")
</pallas_src>

<mosaic_0001>
module attributes {stable_mosaic.version = 11 : i64} {
  func.func @_policy_kernel(%arg0: i32, %arg1: memref<16x32xbf16, #tpu.memory_space<vmem>>, %arg2: memref<32x256xbf16, #tpu.memory_space<vmem>>, %arg3: memref<1x256xf32, #tpu.memory_space<vmem>>, %arg4: memref<256x128xbf16, #tpu.memory_space<vmem>>, %arg5: memref<1x128xf32, #tpu.memory_space<vmem>>, %arg6: memref<128x8xbf16, #tpu.memory_space<vmem>>, %arg7: memref<1x8xf32, #tpu.memory_space<vmem>>, %arg8: memref<16x8xf32, #tpu.memory_space<vmem>>) attributes {dimension_semantics = [#tpu.dimension_semantics<parallel>], iteration_bounds = array<i64: 1>, scalar_prefetch = 0 : i64, scratch_operands = 0 : i64, tpu.core_type = #tpu.core_type<tc>, window_params = [{transform_indices = @transform_0, window_bounds = array<i64: 16, 32>}, {pipeline_mode = #tpu.pipeline_mode<synchronous>, transform_indices = @transform_1, window_bounds = array<i64: 32, 256>}, {pipeline_mode = #tpu.pipeline_mode<synchronous>, transform_indices = @transform_2, window_bounds = array<i64: 1, 256>}, {pipeline_mode = #tpu.pipeline_mode<synchronous>, transform_indices = @transform_3, window_bounds = array<i64: 256, 128>}, {pipeline_mode = #tpu.pipeline_mode<synchronous>, transform_indices = @transform_4, window_bounds = array<i64: 1, 128>}, {pipeline_mode = #tpu.pipeline_mode<synchronous>, transform_indices = @transform_5, window_bounds = array<i64: 128, 8>}, {pipeline_mode = #tpu.pipeline_mode<synchronous>, transform_indices = @transform_6, window_bounds = array<i64: 1, 8>}, {transform_indices = @transform_7, window_bounds = array<i64: 16, 8>}]} {
    %c0 = arith.constant 0 : index
    %c0_0 = arith.constant 0 : index
    %0 = vector.load %arg1[%c0, %c0_0] : memref<16x32xbf16, #tpu.memory_space<vmem>>, vector<16x32xbf16>
    %c0_1 = arith.constant 0 : index
    %c0_2 = arith.constant 0 : index
    %1 = vector.load %arg2[%c0_1, %c0_2] : memref<32x256xbf16, #tpu.memory_space<vmem>>, vector<32x256xbf16>
    %cst = arith.constant dense<0.000000e+00> : vector<16x256xf32>
    %2 = tpu.matmul %0, %1, %cst {dimension_numbers = #tpu.dot_dimension_numbers<[1], [0], [0], [1], [0, 0, 1, 1], [], []>} : vector<16x32xbf16>, vector<32x256xbf16>, vector<16x256xf32> -> vector<16x256xf32>
    %c0_3 = arith.constant 0 : index
    %c0_4 = arith.constant 0 : index
    %3 = vector.load %arg3[%c0_3, %c0_4] : memref<1x256xf32, #tpu.memory_space<vmem>>, vector<1x256xf32>
    %4 = vector.broadcast %3 : vector<1x256xf32> to vector<16x256xf32>
    %5 = arith.addf %2, %4 : vector<16x256xf32>
    %cst_5 = arith.constant 0.000000e+00 : f32
    %6 = vector.broadcast %cst_5 : f32 to vector<16x256xf32>
    %7 = arith.maximumf %5, %6 : vector<16x256xf32>
    %8 = arith.truncf %7 : vector<16x256xf32> to vector<16x256xbf16>
    %c0_6 = arith.constant 0 : index
    %c0_7 = arith.constant 0 : index
    %9 = vector.load %arg4[%c0_6, %c0_7] : memref<256x128xbf16, #tpu.memory_space<vmem>>, vector<256x128xbf16>
    %cst_8 = arith.constant dense<0.000000e+00> : vector<16x128xf32>
    %10 = tpu.matmul %8, %9, %cst_8 {dimension_numbers = #tpu.dot_dimension_numbers<[1], [0], [0], [1], [0, 0, 1, 1], [], []>} : vector<16x256xbf16>, vector<256x128xbf16>, vector<16x128xf32> -> vector<16x128xf32>
    %c0_9 = arith.constant 0 : index
    %c0_10 = arith.constant 0 : index
    %11 = vector.load %arg5[%c0_9, %c0_10] : memref<1x128xf32, #tpu.memory_space<vmem>>, vector<1x128xf32>
    %12 = vector.broadcast %11 : vector<1x128xf32> to vector<16x128xf32>
    %13 = arith.addf %10, %12 : vector<16x128xf32>
    %cst_11 = arith.constant 0.000000e+00 : f32
    %14 = vector.broadcast %cst_11 : f32 to vector<16x128xf32>
    %15 = arith.maximumf %13, %14 : vector<16x128xf32>
    %16 = arith.truncf %15 : vector<16x128xf32> to vector<16x128xbf16>
    %c0_12 = arith.constant 0 : index
    %c0_13 = arith.constant 0 : index
    %17 = vector.load %arg6[%c0_12, %c0_13] : memref<128x8xbf16, #tpu.memory_space<vmem>>, vector<128x8xbf16>
    %cst_14 = arith.constant dense<0.000000e+00> : vector<16x8xf32>
    %18 = tpu.matmul %16, %17, %cst_14 {dimension_numbers = #tpu.dot_dimension_numbers<[1], [0], [0], [1], [0, 0, 1, 1], [], []>} : vector<16x128xbf16>, vector<128x8xbf16>, vector<16x8xf32> -> vector<16x8xf32>
    %c0_15 = arith.constant 0 : index
    %c0_16 = arith.constant 0 : index
    %19 = vector.load %arg7[%c0_15, %c0_16] : memref<1x8xf32, #tpu.memory_space<vmem>>, vector<1x8xf32>
    %20 = vector.broadcast %19 : vector<1x8xf32> to vector<16x8xf32>
    %21 = arith.addf %18, %20 : vector<16x8xf32>
    %cst_17 = arith.constant 0.000000e+00 : f32
    %22 = vector.broadcast %cst_17 : f32 to vector<16x8xf32>
    %23 = arith.subf %22, %21 : vector<16x8xf32>
    %24 = math.exp %23 : vector<16x8xf32>
    %cst_18 = arith.constant 1.000000e+00 : f32
    %25 = vector.broadcast %cst_18 : f32 to vector<16x8xf32>
    %26 = arith.addf %25, %24 : vector<16x8xf32>
    %27 = tpu.reciprocal %26 {approx = true} : vector<16x8xf32> -> vector<16x8xf32>
    %28 = tpu.iota {dimensions = array<i32: 1>} : vector<16x8xi32>
    %c4_i32 = arith.constant 4 : i32
    %29 = vector.broadcast %c4_i32 : i32 to vector<16x8xi32>
    %30 = arith.cmpi sge, %28, %29 : vector<16x8xi32>
    %31 = arith.select %30, %27, %21 : vector<16x8xi1>, vector<16x8xf32>
    %c0_19 = arith.constant 0 : index
    %c0_20 = arith.constant 0 : index
    %32 = vector.load %arg8[%c0_19, %c0_20] : memref<16x8xf32, #tpu.memory_space<vmem>>, vector<16x8xf32>
    tpu.vector_store %arg8[%c0_19, %c0_20], %31 {strides = array<i32>} : memref<16x8xf32, #tpu.memory_space<vmem>>, vector<16x8xf32>,
    return
  }
  func.func @transform_0(%arg0: i32) -> (i32, i32) {
    %c0_i32 = arith.constant 0 : i32
    %c0_i32_0 = arith.constant 0 : i32
    return %arg0, %c0_i32 : i32, i32
  }
  func.func @transform_1(%arg0: i32) -> (i32, i32) {
    %c0_i32 = arith.constant 0 : i32
    %c0_i32_0 = arith.constant 0 : i32
    %c0_i32_1 = arith.constant 0 : i32
    return %c0_i32, %c0_i32_0 : i32, i32
  }
  func.func @transform_2(%arg0: i32) -> (i32, i32) {
    %c0_i32 = arith.constant 0 : i32
    %c0_i32_0 = arith.constant 0 : i32
    %c0_i32_1 = arith.constant 0 : i32
    return %c0_i32, %c0_i32_0 : i32, i32
  }
  func.func @transform_3(%arg0: i32) -> (i32, i32) {
    %c0_i32 = arith.constant 0 : i32
    %c0_i32_0 = arith.constant 0 : i32
    %c0_i32_1 = arith.constant 0 : i32
    return %c0_i32, %c0_i32_0 : i32, i32
  }
  func.func @transform_4(%arg0: i32) -> (i32, i32) {
    %c0_i32 = arith.constant 0 : i32
    %c0_i32_0 = arith.constant 0 : i32
    %c0_i32_1 = arith.constant 0 : i32
    return %c0_i32, %c0_i32_0 : i32, i32
  }
  func.func @transform_5(%arg0: i32) -> (i32, i32) {
    %c0_i32 = arith.constant 0 : i32
    %c0_i32_0 = arith.constant 0 : i32
    %c0_i32_1 = arith.constant 0 : i32
    return %c0_i32, %c0_i32_0 : i32, i32
  }
  func.func @transform_6(%arg0: i32) -> (i32, i32) {
    %c0_i32 = arith.constant 0 : i32
    %c0_i32_0 = arith.constant 0 : i32
    %c0_i32_1 = arith.constant 0 : i32
    return %c0_i32, %c0_i32_0 : i32, i32
  }
  func.func @transform_7(%arg0: i32) -> (i32, i32) {
    %c0_i32 = arith.constant 0 : i32
    %c0_i32_0 = arith.constant 0 : i32
    return %arg0, %c0_i32 : i32, i32
  }
}

</mosaic_0001>

<llo_original>
// kernel: tpu_custom_call.1
$region0: #{tpu_custom_call.1}
  #allocation0 [shape = 'u32[]', space=smem, size = 0x4, offset = 0x4, fixed_abs, tag = 'smem constant byte address 0x4 - core index']
  #allocation1 [shape = 'u32[72,128]{1,0:T(1,128)}', space=vmem, size = 0x9000, scoped, tag = 'internal scratch']
  %s0 = inlined_call_operand.vmem [shape: bf16[16,32], index: 0, kind: input, shape index: {}]
  %s1 = inlined_call_operand.vmem [shape: bf16[32,256], index: 1, kind: input, shape index: {}]
  %s2 = inlined_call_operand.vmem [shape: f32[1,256], index: 2, kind: input, shape index: {}]
  %s3 = inlined_call_operand.hbm [shape: bf16[256,128], index: 3, kind: input, shape index: {}]
  %s4 = inlined_call_operand.vmem [shape: f32[1,128], index: 4, kind: input, shape index: {}]
  %s5 = inlined_call_operand.vmem [shape: bf16[128,8], index: 5, kind: input, shape index: {}]
  %s6 = inlined_call_operand.vmem [shape: f32[1,8], index: 6, kind: input, shape index: {}]
  %s7 = inlined_call_operand.vmem [shape: f32[16,8], index: 7, kind: output, shape index: {}]
  %s8 = sld [smem:[#allocation0]]
  $region42: #{tpu_custom_call.1} parent=0
    _
  %s10 = ssub.s32 1, %s8
  %s11 = scalar_select 0, %s10, %s8
  $region1: #{tpu_custom_call.1} parent=0
    #allocation2 [shape = 'u8[65536]{0}', space=vmem, size = 0x10000, scoped, tag = 'input window, operand 3, single buffered']
    #allocation3 [shape = 's32[1]{0}', space=sflag, size = 0x4, scoped, tag = 'scoped memory for tpu_custom_call.1']
    %12 = vsyncpa [#allocation3], 0
    // Predicated region
    $region2: #{tpu_custom_call.1} parent=1 // pred_check
      _
    $region3: #{tpu_custom_call.1} parent=1 // pred_check_branch
      %14 = sbr.rel (0) target = $region5
    $region4: #{tpu_custom_call.1} parent=1 // pred_region
      _
    $region5: #{tpu_custom_call.1} parent=1 // pred_fallthru
      _
    // Predicated region
    $region6: #{tpu_custom_call.1} parent=1 // pred_check
      _
    $region7: #{tpu_custom_call.1} parent=1 // pred_check_branch
      %16 = sbr.rel (0) target = $region9
    $region8: #{tpu_custom_call.1} parent=1 // pred_region
      _
    $region9: #{tpu_custom_call.1} parent=1 // pred_fallthru
      _
    // Predicated region
    $region10: #{tpu_custom_call.1} parent=1 // pred_check
      _
    $region11: #{tpu_custom_call.1} parent=1 // pred_check_branch
      %18 = sbr.rel (0) target = $region13
    $region12: #{tpu_custom_call.1} parent=1 // pred_region
      _
    $region13: #{tpu_custom_call.1} parent=1 // pred_fallthru
      _
    // Predicated region
    $region14: #{tpu_custom_call.1} parent=1 // pred_check
      _
    $region15: #{tpu_custom_call.1} parent=1 // pred_check_branch
      %20 = sbr.rel (0) target = $region17
    $region16: #{tpu_custom_call.1} parent=1 // pred_region
      %22 = vsyncadd [#allocation3], 0
      %s23 = sshll.u32 %s3, 4
      %s24 = int_to_ptr.hbm [resolvable:$true] %s23
      %s25 = sshll.u32 [#allocation2], 4
      %s26 = int_to_ptr.vmem [resolvable:$true] %s25
      %31 = dma.hbm_to_vmem [thread:$0]  %s24, 2048, %s26, [#allocation3], 64, 64, 4
    $region17: #{tpu_custom_call.1} parent=1 // pred_fallthru
      _
    // Predicated region
    $region18: #{tpu_custom_call.1} parent=1 // pred_check
      _
    $region19: #{tpu_custom_call.1} parent=1 // pred_check_branch
      %33 = sbr.rel (0) target = $region21
    $region20: #{tpu_custom_call.1} parent=1 // pred_region
      _
    $region21: #{tpu_custom_call.1} parent=1 // pred_fallthru
      _
    // Predicated region
    $region22: #{tpu_custom_call.1} parent=1 // pred_check
      _
    $region23: #{tpu_custom_call.1} parent=1 // pred_check_branch
      %35 = sbr.rel (0) target = $region25
    $region24: #{tpu_custom_call.1} parent=1 // pred_region
      _
    $region25: #{tpu_custom_call.1} parent=1 // pred_fallthru
      _
    // Predicated region
    $region26: #{tpu_custom_call.1} parent=1 // pred_check
      _
    $region27: #{tpu_custom_call.1} parent=1 // pred_check_branch
      %37 = sbr.rel (0) target = $region29
    $region28: #{tpu_custom_call.1} parent=1 // pred_region
      _
    $region29: #{tpu_custom_call.1} parent=1 // pred_fallthru
      _
    // Predicated region
    $region30: #{tpu_custom_call.1} parent=1 // pred_check
      _
    $region31: #{tpu_custom_call.1} parent=1 // pred_check_branch
      %39 = sbr.rel (0) target = $region33
    $region32: #{tpu_custom_call.1} parent=1 // pred_region
      %41 = dma.done [#allocation3], 2048
    $region33: #{tpu_custom_call.1} parent=1 // pred_fallthru
      _
    %v43 = vld [vmem:[%s0] sm:$0xf]
    %v44 = vld [vmem:[%s0 + $0x4] sm:$0xf]
    %v45 = vld [vmem:[%s1] sm:$0xff]
    %v46 = vld [vmem:[%s1 + $0x8] sm:$0xff]
    %v47 = vld [vmem:[%s1 + $0x10] sm:$0xff]
    %v48 = vld [vmem:[%s1 + $0x18] sm:$0xff]
    %v49 = vld [vmem:[%s2] sm:$0x3]
    %v51 = vperm.slane %v49, 0
    %v52 = vperm.slane %v49, 1
    %v57 = vunpack.c.l.b16 %v43
    %v58 = vunpack.c.l.b16 %v44
    %v59 = vpack.c.b16 %v58, %v57
    %v64 = vunpack.c.l.b16 %v45
    %v65 = vunpack.c.h.b16 %v45
    %v66 = vunpack.c.l.b16 %v46
    %v67 = vunpack.c.h.b16 %v46
    %v68 = vunpack.c.l.b16 %v47
    %v69 = vunpack.c.h.b16 %v47
    %v70 = vunpack.c.l.b16 %v48
    %v71 = vunpack.c.h.b16 %v48
    %v72 = vpack.c.b16 %v66, %v64
    %v73 = vpack.c.b16 %v67, %v65
    %v74 = vpack.c.b16 %v70, %v68
    %v75 = vpack.c.b16 %v71, %v69
    %vm80 = vcmask 261120
    %v82 = vsel %vm80, %v59, 0
    %84 = vmatpush.bf16.msra.mxu0 0
    %85 = vmatpush.bf16.msra.mxu0 0
    %86 = vmatpush.bf16.msra.mxu0 0
    %87 = vmatpush.bf16.msra.mxu0 0
    %88 = vmatpush.bf16.msra.mxu0 0
    %89 = vmatpush.bf16.msra.mxu0 0
    %90 = vmatpush.bf16.msra.mxu0 %v74
    %91 = vmatpush.bf16.msra.mxu0 %v72
    %92 = vmatmul.bf16.gmra.mxu0 %v82
    %v93 = vpop.f32.mrf.mxu0
    %v94 = vadd.f32 %v51, %v93
    %v95 = vpop.f32.mrf.mxu0
    %v96 = vadd.f32 %v51, %v95
    %97 = vdwg.mxu0
    %98 = vmatpush.bf16.msra.mxu0 0
    %99 = vmatpush.bf16.msra.mxu0 0
    %100 = vmatpush.bf16.msra.mxu0 0
    %101 = vmatpush.bf16.msra.mxu0 0
    %102 = vmatpush.bf16.msra.mxu0 0
    %103 = vmatpush.bf16.msra.mxu0 0
    %104 = vmatpush.bf16.msra.mxu0 %v75
    %105 = vmatpush.bf16.msra.mxu0 %v73
    %106 = vmatmul.bf16.gmra.mxu0 %v82
    %v107 = vpop.f32.mrf.mxu0
    %v108 = vadd.f32 %v52, %v107
    %v109 = vpop.f32.mrf.mxu0
    %v110 = vadd.f32 %v52, %v109
    %111 = vdwg.mxu0
    %v112 = vmax.f32 %v94, 0.0
    %v113 = vmax.f32 %v108, 0.0
    %v114 = vmax.f32 %v96, 0.0
    %v115 = vmax.f32 %v110, 0.0
    %v116 = vpack.c.bf16 %v114, %v112
    %v117 = vpack.c.bf16 %v115, %v113
    %v118 = vld [vmem:[#allocation2] sm:$0xf]
    %v119 = vld [vmem:[#allocation2 + $0x4] sm:$0xf]
    %v120 = vld [vmem:[#allocation2 + $0x8] sm:$0xf]
    %v121 = vld [vmem:[#allocation2 + $0xc] sm:$0xf]
    %v122 = vld [vmem:[#allocation2 + $0x10] sm:$0xf]
    %v123 = vld [vmem:[#allocation2 + $0x14] sm:$0xf]
    %v124 = vld [vmem:[#allocation2 + $0x18] sm:$0xf]
    %v125 = vld [vmem:[#allocation2 + $0x1c] sm:$0xf]
    %v126 = vld [vmem:[#allocation2 + $0x20] sm:$0xf]
    %v127 = vld [vmem:[#allocation2 + $0x24] sm:$0xf]
    %v128 = vld [vmem:[#allocation2 + $0x28] sm:$0xf]
    %v129 = vld [vmem:[#allocation2 + $0x2c] sm:$0xf]
    %v130 = vld [vmem:[#allocation2 + $0x30] sm:$0xf]
    %v131 = vld [vmem:[#allocation2 + $0x34] sm:$0xf]
    %v132 = vld [vmem:[#allocation2 + $0x38] sm:$0xf]
    %v133 = vld [vmem:[#allocation2 + $0x3c] sm:$0xf]
    %v134 = vld [vmem:[#allocation2 + $0x40] sm:$0xf]
    %v135 = vld [vmem:[#allocation2 + $0x44] sm:$0xf]
    %v136 = vld [vmem:[#allocation2 + $0x48] sm:$0xf]
    %v137 = vld [vmem:[#allocation2 + $0x4c] sm:$0xf]
    %v138 = vld [vmem:[#allocation2 + $0x50] sm:$0xf]
    %v139 = vld [vmem:[#allocation2 + $0x54] sm:$0xf]
    %v140 = vld [vmem:[#allocation2 + $0x58] sm:$0xf]
    %v141 = vld [vmem:[#allocation2 + $0x5c] sm:$0xf]
    %v142 = vld [vmem:[#allocation2 + $0x60] sm:$0xf]
    %v143 = vld [vmem:[#allocation2 + $0x64] sm:$0xf]
    %v144 = vld [vmem:[#allocation2 + $0x68] sm:$0xf]
    %v145 = vld [vmem:[#allocation2 + $0x6c] sm:$0xf]
    %v146 = vld [vmem:[#allocation2 + $0x70] sm:$0xf]
    %v147 = vld [vmem:[#allocation2 + $0x74] sm:$0xf]
    %v148 = vld [vmem:[#allocation2 + $0x78] sm:$0xf]
    %v149 = vld [vmem:[#allocation2 + $0x7c] sm:$0xf]
    %v150 = vld [vmem:[%s4] sm:$0x1]
    %v152 = vperm.slane %v150, 0
    %v186 = vunpack.c.l.b16 %v118
    %v187 = vunpack.c.l.b16 %v119
    %v188 = vunpack.c.l.b16 %v120
    %v189 = vunpack.c.l.b16 %v121
    %v190 = vunpack.c.l.b16 %v122
    %v191 = vunpack.c.l.b16 %v123
    %v192 = vunpack.c.l.b16 %v124
    %v193 = vunpack.c.l.b16 %v125
    %v194 = vunpack.c.l.b16 %v126
    %v195 = vunpack.c.l.b16 %v127
    %v196 = vunpack.c.l.b16 %v128
    %v197 = vunpack.c.l.b16 %v129
    %v198 = vunpack.c.l.b16 %v130
    %v199 = vunpack.c.l.b16 %v131
    %v200 = vunpack.c.l.b16 %v132
    %v201 = vunpack.c.l.b16 %v133
    %v202 = vunpack.c.l.b16 %v134
    %v203 = vunpack.c.l.b16 %v135
    %v204 = vunpack.c.l.b16 %v136
    %v205 = vunpack.c.l.b16 %v137
    %v206 = vunpack.c.l.b16 %v138
    %v207 = vunpack.c.l.b16 %v139
    %v208 = vunpack.c.l.b16 %v140
    %v209 = vunpack.c.l.b16 %v141
    %v210 = vunpack.c.l.b16 %v142
    %v211 = vunpack.c.l.b16 %v143
    %v212 = vunpack.c.l.b16 %v144
    %v213 = vunpack.c.l.b16 %v145
    %v214 = vunpack.c.l.b16 %v146
    %v215 = vunpack.c.l.b16 %v147
    %v216 = vunpack.c.l.b16 %v148
    %v217 = vunpack.c.l.b16 %v149
    %v218 = vpack.c.b16 %v187, %v186
    %v219 = vpack.c.b16 %v189, %v188
    %v220 = vpack.c.b16 %v191, %v190
    %v221 = vpack.c.b16 %v193, %v192
    %v222 = vpack.c.b16 %v195, %v194
    %v223 = vpack.c.b16 %v197, %v196
    %v224 = vpack.c.b16 %v199, %v198
    %v225 = vpack.c.b16 %v201, %v200
    %v226 = vpack.c.b16 %v203, %v202
    %v227 = vpack.c.b16 %v205, %v204
    %v228 = vpack.c.b16 %v207, %v206
    %v229 = vpack.c.b16 %v209, %v208
    %v230 = vpack.c.b16 %v211, %v210
    %v231 = vpack.c.b16 %v213, %v212
    %v232 = vpack.c.b16 %v215, %v214
    %v233 = vpack.c.b16 %v217, %v216
    %250 = vmatpush.bf16.msra.mxu0 %v225
    %251 = vmatpush.bf16.msra.mxu0 %v224
    %252 = vmatpush.bf16.msra.mxu0 %v223
    %253 = vmatpush.bf16.msra.mxu0 %v222
    %254 = vmatpush.bf16.msra.mxu0 %v221
    %255 = vmatpush.bf16.msra.mxu0 %v220
    %256 = vmatpush.bf16.msra.mxu0 %v219
    %257 = vmatpush.bf16.msra.mxu0 %v218
    %258 = vmatmul.bf16.gmra.mxu0 %v116
    %v259 = vpop.f32.mrf.mxu0
    %v260 = vadd.f32 %v152, %v259
    %v261 = vpop.f32.mrf.mxu0
    %v262 = vadd.f32 %v152, %v261
    %263 = vdwg.mxu0
    %264 = vmatpush.bf16.msra.mxu0 %v233
    %265 = vmatpush.bf16.msra.mxu0 %v232
    %266 = vmatpush.bf16.msra.mxu0 %v231
    %267 = vmatpush.bf16.msra.mxu0 %v230
    %268 = vmatpush.bf16.msra.mxu0 %v229
    %269 = vmatpush.bf16.msra.mxu0 %v228
    %270 = vmatpush.bf16.msra.mxu0 %v227
    %271 = vmatpush.bf16.msra.mxu0 %v226
    %272 = vmatmul.bf16.gmra.mxu0 %v117
    %v273 = vpop.f32.mrf.mxu0
    %v274 = vadd.f32 %v260, %v273
    %v275 = vpop.f32.mrf.mxu0
    %v276 = vadd.f32 %v262, %v275
    %277 = vdwg.mxu0
    %v278 = vmax.f32 %v274, 0.0
    %v279 = vmax.f32 %v276, 0.0
    %v280 = vpack.c.bf16 %v279, %v278
    %v281 = vld [vmem:[%s5] sm:$0xf]
    %v282 = vld [vmem:[%s5 + $0x4] sm:$0xf]
    %v283 = vld [vmem:[%s5 + $0x8] sm:$0xf]
    %v284 = vld [vmem:[%s5 + $0xc] sm:$0xf]
    %v285 = vld [vmem:[%s5 + $0x10] sm:$0xf]
    %v286 = vld [vmem:[%s5 + $0x14] sm:$0xf]
    %v287 = vld [vmem:[%s5 + $0x18] sm:$0xf]
    %v288 = vld [vmem:[%s5 + $0x1c] sm:$0xf]
    %v289 = vld [vmem:[%s5 + $0x20] sm:$0xf]
    %v290 = vld [vmem:[%s5 + $0x24] sm:$0xf]
    %v291 = vld [vmem:[%s5 + $0x28] sm:$0xf]
    %v292 = vld [vmem:[%s5 + $0x2c] sm:$0xf]
    %v293 = vld [vmem:[%s5 + $0x30] sm:$0xf]
    %v294 = vld [vmem:[%s5 + $0x34] sm:$0xf]
    %v295 = vld [vmem:[%s5 + $0x38] sm:$0xf]
    %v296 = vld [vmem:[%s5 + $0x3c] sm:$0xf]
    %v297 = vld [vmem:[%s6] sm:$0x1]
    %v299 = vperm.slane %v297, 0
    %v317 = vunpack.c.l.b16 %v281
    %v318 = vunpack.c.l.b16 %v282
    %v319 = vunpack.c.l.b16 %v283
    %v320 = vunpack.c.l.b16 %v284
    %v321 = vunpack.c.l.b16 %v285
    %v322 = vunpack.c.l.b16 %v286
    %v323 = vunpack.c.l.b16 %v287
    %v324 = vunpack.c.l.b16 %v288
    %v325 = vunpack.c.l.b16 %v289
    %v326 = vunpack.c.l.b16 %v290
    %v327 = vunpack.c.l.b16 %v291
    %v328 = vunpack.c.l.b16 %v292
    %v329 = vunpack.c.l.b16 %v293
    %v330 = vunpack.c.l.b16 %v294
    %v331 = vunpack.c.l.b16 %v295
    %v332 = vunpack.c.l.b16 %v296
    %v333 = vpack.c.b16 %v318, %v317
    %v334 = vpack.c.b16 %v320, %v319
    %v335 = vpack.c.b16 %v322, %v321
    %v336 = vpack.c.b16 %v324, %v323
    %v337 = vpack.c.b16 %v326, %v325
    %v338 = vpack.c.b16 %v328, %v327
    %v339 = vpack.c.b16 %v330, %v329
    %v340 = vpack.c.b16 %v332, %v331
    %349 = vmatpush.bf16.msra.mxu0 %v340
    %350 = vmatpush.bf16.msra.mxu0 %v339
    %351 = vmatpush.bf16.msra.mxu0 %v338
    %352 = vmatpush.bf16.msra.mxu0 %v337
    %353 = vmatpush.bf16.msra.mxu0 %v336
    %354 = vmatpush.bf16.msra.mxu0 %v335
    %355 = vmatpush.bf16.msra.mxu0 %v334
    %356 = vmatpush.bf16.msra.mxu0 %v333
    %357 = vmatmul.bf16.gmra.mxu0 %v280
    %v358 = vpop.f32.mrf.mxu0
    %v359 = vadd.f32 %v299, %v358
    %v360 = vpop.f32.mrf.mxu0
    %v361 = vadd.f32 %v299, %v360
    %362 = vdwg.mxu0
    %v363 = vsub.f32 0.0, %v359
    %v364 = vsub.f32 0.0, %v361
    %v365 = vmul.f32 %v363, 1.442695
    %v366 = vpow.pop %v365
    %v367 = vmul.f32 %v364, 1.442695
    %v368 = vpow.pop %v367
    %v369 = vadd.f32 %v366, 1.0
    %v370 = vadd.f32 %v368, 1.0
    %v371 = vrcp.pop %v369
    %v372 = vrcp.pop %v370
    %v373 = vlaneseq
    %v374 = vand.u32 %v373, 127
    %vm375 = vcmp.ge.s32.totalorder %v374, 4
    %v376 = vsel %vm375, %v371, %v359
    %v377 = vsel %vm375, %v372, %v361
    %vm378 = vcmask 64512
    %379 = vst.msk [vmem:[%s7] sm:$0xff] %vm378, %v376
    %380 = vst.msk [vmem:[%s7 + $0x8] sm:$0xff] %vm378, %v377
    // Predicated region
    $region34: #{tpu_custom_call.1} parent=1 // pred_check
      _
    $region35: #{tpu_custom_call.1} parent=1 // pred_check_branch
      %382 = sbr.rel (0) target = $region37
    $region36: #{tpu_custom_call.1} parent=1 // pred_region
      _
    $region37: #{tpu_custom_call.1} parent=1 // pred_fallthru
      _
    // Predicated region
    $region38: #{tpu_custom_call.1} parent=1 // pred_check
      _
    $region39: #{tpu_custom_call.1} parent=1 // pred_check_branch
      %384 = sbr.rel (0) target = $region41
    $region40: #{tpu_custom_call.1} parent=1 // pred_region
      _
    $region41: #{tpu_custom_call.1} parent=1 // pred_fallthru
      _
    %385 = vsyncpa [#allocation3], 1

</llo_original>
